<compile_context>
chip_gen: v5e
topology: v5e:2x2
jax: 0.10.0
libtpu: 0.0.40
codegen_flags: <defaults>
</compile_context>

<pallas_src>
import functools

import jax
import jax.numpy as jnp
from jax.experimental import pallas as pl
from jax.experimental.pallas import tpu as pltpu


def _fused_actor_kernel(x_ref, w1_ref, b1_ref, w2_ref, b2_ref, w3_ref, b3_ref, out_ref):
    # x_ref:  (Bt, A*IN)      w1_ref: (A*IN, A*H1)    b1_ref: (1, A*H1)   f32
    # w2_ref: (A*H1, A*H2)    b2_ref: (1, A*H2)       f32
    # w3_ref: (A*H2, OUT_PAD) b3_ref: (1, OUT_PAD)    f32
    # out_ref: (Bt, OUT_PAD)  f32
    wdt = w1_ref.dtype  # f32 (default) or bf16 (halved HBM traffic, native MXU path)
    x = x_ref[...].astype(wdt)
    h1 = jnp.dot(x, w1_ref[...], preferred_element_type=jnp.float32) + b1_ref[...]
    h1 = jnp.maximum(h1, 0.0)                                     # ReLU (f32)
    h2 = jnp.dot(h1.astype(wdt), w2_ref[...], preferred_element_type=jnp.float32) + b2_ref[...]
    h2 = jnp.maximum(h2, 0.0)                                     # ReLU (f32)
    out = jnp.dot(h2.astype(wdt), w3_ref[...], preferred_element_type=jnp.float32) + b3_ref[...]
    out_ref[...] = out.astype(out_ref.dtype)                      # output_activate=None


def _round_up(x, m):
    return ((x + m - 1) // m) * m


def _block_diag(w):
    """Stacked per-actor (A, din, dout) -> block-diagonal (A*din, A*dout)."""
    A, din, dout = w.shape
    eye = jnp.eye(A, dtype=w.dtype)
    return jnp.einsum("ipq,ij->ipjq", w, eye).reshape(A * din, A * dout)


def prepare_fused_params(params, weights_dtype=jnp.float32):
    """One-time plumbing: block-diagonal weights (optionally bf16), concatenated
    lane-dense f32 biases, output dim zero-padded to a multiple of 128 lanes."""
    A, IN, H1 = params["w1"].shape
    _, _, H2 = params["w2"].shape
    _, _, OUT = params["w3"].shape
    out_total = A * OUT
    out_pad = _round_up(max(out_total, 128), 128)

    w1_bd = _block_diag(params["w1"])                       # (A*IN, A*H1)
    w2_bd = _block_diag(params["w2"])                       # (A*H1, A*H2)
    w3_bd = _block_diag(params["w3"])                       # (A*H2, A*OUT)
    w3_bd = jnp.pad(w3_bd, ((0, 0), (0, out_pad - out_total)))

    b1 = params["b1"].reshape(1, A * H1).astype(jnp.float32)
    b2 = params["b2"].reshape(1, A * H2).astype(jnp.float32)
    b3 = jnp.pad(params["b3"].reshape(1, out_total), ((0, 0), (0, out_pad - out_total)))
    b3 = b3.astype(jnp.float32)

    return {
        "w1": w1_bd.astype(weights_dtype), "b1": b1,
        "w2": w2_bd.astype(weights_dtype), "b2": b2,
        "w3": w3_bd.astype(weights_dtype), "b3": b3,
        "out_total": int(out_total),
    }


@functools.partial(jax.jit, static_argnames=("out_total",))
def _actor_forward_fused(x, w1, b1, w2, b2, w3, b3, *, out_total):
    B, K_IN = x.shape
    H1 = w1.shape[1]
    H2 = w2.shape[1]
    OUT_PAD = w3.shape[1]

    # Launch/DMA-latency bound: use the biggest reasonable batch tile.
    # f32 sublane rule: tile rows must be a multiple of 8.
    b_tile = min(1024, _round_up(B, 8))
    grid = (pl.cdiv(B, b_tile),)

    # Weights/biases never change across grid steps -> single-buffer them.
    resident = dict(pipeline_mode=pl.Buffered(1))

    out = pl.pallas_call(
        _fused_actor_kernel,
        out_shape=jax.ShapeDtypeStruct((B, OUT_PAD), jnp.float32),
        grid_spec=pltpu.PrefetchScalarGridSpec(
            num_scalar_prefetch=0,
            grid=grid,
            in_specs=[
                pl.BlockSpec((b_tile, K_IN), lambda i: (i, 0)),
                pl.BlockSpec((K_IN, H1), lambda i: (0, 0), **resident),
                pl.BlockSpec((1, H1), lambda i: (0, 0), **resident),
                pl.BlockSpec((H1, H2), lambda i: (0, 0), **resident),
                pl.BlockSpec((1, H2), lambda i: (0, 0), **resident),
                pl.BlockSpec((H2, OUT_PAD), lambda i: (0, 0), **resident),
                pl.BlockSpec((1, OUT_PAD), lambda i: (0, 0), **resident),
            ],
            out_specs=pl.BlockSpec((b_tile, OUT_PAD), lambda i: (i, 0)),
        ),
        compiler_params=pltpu.CompilerParams(
            # Batch tiles are independent -> let v7x's two TensorCores split them.
            dimension_semantics=("parallel",),
        ),
    )(x, w1, b1, w2, b2, w3, b3)

    if out_total == OUT_PAD:
        return out                  # already lane-dense; no extra HBM round trip
    return out[:, :out_total]


def actor_forward(obs, fused_params):
    """obs: (batch, num_actor, input_size); fused_params from prepare_fused_params.
    Returns (batch, num_actor * output_size) matching torch.cat(actions, dim=1)."""
    B, A, IN = obs.shape
    x = obs.reshape(B, A * IN)   # row-major flatten == concat per-actor obs along features
    return _actor_forward_fused(
        x,
        fused_params["w1"], fused_params["b1"],
        fused_params["w2"], fused_params["b2"],
        fused_params["w3"], fused_params["b3"],
        out_total=fused_params["out_total"],
    )


def init_params(key, num_actor, input_size, output_size, hidden=(64, 64)):
    h1, h2 = hidden
    keys = jax.random.split(key, 6)
    scale = 0.1
    return {
        "w1": scale * jax.random.normal(keys[0], (num_actor, input_size, h1), jnp.float32),
        "b1": scale * jax.random.normal(keys[1], (num_actor, h1), jnp.float32),
        "w2": scale * jax.random.normal(keys[2], (num_actor, h1, h2), jnp.float32),
        "b2": scale * jax.random.normal(keys[3], (num_actor, h2), jnp.float32),
        "w3": scale * jax.random.normal(keys[4], (num_actor, h2, output_size), jnp.float32),
        "b3": scale * jax.random.normal(keys[5], (num_actor, output_size), jnp.float32),
    }


def actor_forward_ref(obs, params):
    """Plain-JAX reference of the PyTorch forward (per-actor MLPs + cat(dim=1))."""
    outs = []
    for i in range(obs.shape[1]):
        x = obs[:, i, :]
        h1 = jnp.maximum(x @ params["w1"][i] + params["b1"][i], 0.0)
        h2 = jnp.maximum(h1 @ params["w2"][i] + params["b2"][i], 0.0)
        outs.append(h2 @ params["w3"][i] + params["b3"][i])
    return jnp.concatenate(outs, axis=1)


if __name__ == "__main__":
    key = jax.random.PRNGKey(0)
    k_obs, k_par = jax.random.split(key)

    num_actor = 2
    batch = 8
    input_size = 16
    output_size = 8

    obs = jax.random.normal(k_obs, (batch, num_actor, input_size), jnp.float32)
    params = init_params(k_par, num_actor, input_size, output_size)
    ref = actor_forward_ref(obs, params)

    # Default f32 weights (bit-faithful to the PyTorch module).
    fused_f32 = prepare_fused_params(params)
    out = jax.block_until_ready(actor_forward(obs, fused_f32))
    assert out.shape == (batch, num_actor * output_size), out.shape
    assert jnp.allclose(out, ref, atol=1e-5, rtol=1e-5), "f32 mismatch vs reference"

    # bf16-weight path (halved weight HBM/VMEM traffic, native MXU) — looser tolerance.
    fused_bf16 = prepare_fused_params(params, weights_dtype=jnp.bfloat16)
    out_bf16 = jax.block_until_ready(actor_forward(obs, fused_bf16))
    assert out_bf16.shape == (batch, num_actor * output_size), out_bf16.shape
    assert jnp.allclose(out_bf16, ref, atol=5e-2, rtol=5e-2), "bf16 mismatch vs reference"

    print("KERNEL_OK")
</pallas_src>

<mosaic_0001>
module attributes {stable_mosaic.version = 11 : i64} {
  func.func @_fused_actor_kernel(%arg0: i32, %arg1: memref<8x32xf32, #tpu.memory_space<vmem>>, %arg2: memref<32x128xf32, #tpu.memory_space<vmem>>, %arg3: memref<1x128xf32, #tpu.memory_space<vmem>>, %arg4: memref<128x128xf32, #tpu.memory_space<vmem>>, %arg5: memref<1x128xf32, #tpu.memory_space<vmem>>, %arg6: memref<128x128xf32, #tpu.memory_space<vmem>>, %arg7: memref<1x128xf32, #tpu.memory_space<vmem>>, %arg8: memref<8x128xf32, #tpu.memory_space<vmem>>) attributes {dimension_semantics = [#tpu.dimension_semantics<parallel>], iteration_bounds = array<i64: 1>, scalar_prefetch = 0 : i64, scratch_operands = 0 : i64, tpu.core_type = #tpu.core_type<tc>, window_params = [{transform_indices = @transform_0, window_bounds = array<i64: 8, 32>}, {pipeline_mode = #tpu.pipeline_mode<synchronous>, transform_indices = @transform_1, window_bounds = array<i64: 32, 128>}, {pipeline_mode = #tpu.pipeline_mode<synchronous>, transform_indices = @transform_2, window_bounds = array<i64: 1, 128>}, {pipeline_mode = #tpu.pipeline_mode<synchronous>, transform_indices = @transform_3, window_bounds = array<i64: 128, 128>}, {pipeline_mode = #tpu.pipeline_mode<synchronous>, transform_indices = @transform_4, window_bounds = array<i64: 1, 128>}, {pipeline_mode = #tpu.pipeline_mode<synchronous>, transform_indices = @transform_5, window_bounds = array<i64: 128, 128>}, {pipeline_mode = #tpu.pipeline_mode<synchronous>, transform_indices = @transform_6, window_bounds = array<i64: 1, 128>}, {transform_indices = @transform_7, window_bounds = array<i64: 8, 128>}]} {
    %c0 = arith.constant 0 : index
    %c0_0 = arith.constant 0 : index
    %0 = vector.load %arg1[%c0, %c0_0] : memref<8x32xf32, #tpu.memory_space<vmem>>, vector<8x32xf32>
    %c0_1 = arith.constant 0 : index
    %c0_2 = arith.constant 0 : index
    %1 = vector.load %arg2[%c0_1, %c0_2] : memref<32x128xf32, #tpu.memory_space<vmem>>, vector<32x128xf32>
    %cst = arith.constant dense<0.000000e+00> : vector<8x128xf32>
    %2 = tpu.matmul %0, %1, %cst {dimension_numbers = #tpu.dot_dimension_numbers<[1], [0], [0], [1], [0, 0, 1, 1], [], []>} : vector<8x32xf32>, vector<32x128xf32>, vector<8x128xf32> -> vector<8x128xf32>
    %c0_3 = arith.constant 0 : index
    %c0_4 = arith.constant 0 : index
    %3 = vector.load %arg3[%c0_3, %c0_4] : memref<1x128xf32, #tpu.memory_space<vmem>>, vector<1x128xf32>
    %4 = vector.broadcast %3 : vector<1x128xf32> to vector<8x128xf32>
    %5 = arith.addf %2, %4 : vector<8x128xf32>
    %cst_5 = arith.constant 0.000000e+00 : f32
    %6 = vector.broadcast %cst_5 : f32 to vector<8x128xf32>
    %7 = arith.maximumf %5, %6 : vector<8x128xf32>
    %c0_6 = arith.constant 0 : index
    %c0_7 = arith.constant 0 : index
    %8 = vector.load %arg4[%c0_6, %c0_7] : memref<128x128xf32, #tpu.memory_space<vmem>>, vector<128x128xf32>
    %cst_8 = arith.constant dense<0.000000e+00> : vector<8x128xf32>
    %9 = tpu.matmul %7, %8, %cst_8 {dimension_numbers = #tpu.dot_dimension_numbers<[1], [0], [0], [1], [0, 0, 1, 1], [], []>} : vector<8x128xf32>, vector<128x128xf32>, vector<8x128xf32> -> vector<8x128xf32>
    %c0_9 = arith.constant 0 : index
    %c0_10 = arith.constant 0 : index
    %10 = vector.load %arg5[%c0_9, %c0_10] : memref<1x128xf32, #tpu.memory_space<vmem>>, vector<1x128xf32>
    %11 = vector.broadcast %10 : vector<1x128xf32> to vector<8x128xf32>
    %12 = arith.addf %9, %11 : vector<8x128xf32>
    %cst_11 = arith.constant 0.000000e+00 : f32
    %13 = vector.broadcast %cst_11 : f32 to vector<8x128xf32>
    %14 = arith.maximumf %12, %13 : vector<8x128xf32>
    %c0_12 = arith.constant 0 : index
    %c0_13 = arith.constant 0 : index
    %15 = vector.load %arg6[%c0_12, %c0_13] : memref<128x128xf32, #tpu.memory_space<vmem>>, vector<128x128xf32>
    %cst_14 = arith.constant dense<0.000000e+00> : vector<8x128xf32>
    %16 = tpu.matmul %14, %15, %cst_14 {dimension_numbers = #tpu.dot_dimension_numbers<[1], [0], [0], [1], [0, 0, 1, 1], [], []>} : vector<8x128xf32>, vector<128x128xf32>, vector<8x128xf32> -> vector<8x128xf32>
    %c0_15 = arith.constant 0 : index
    %c0_16 = arith.constant 0 : index
    %17 = vector.load %arg7[%c0_15, %c0_16] : memref<1x128xf32, #tpu.memory_space<vmem>>, vector<1x128xf32>
    %18 = vector.broadcast %17 : vector<1x128xf32> to vector<8x128xf32>
    %19 = arith.addf %16, %18 : vector<8x128xf32>
    %c0_17 = arith.constant 0 : index
    %c0_18 = arith.constant 0 : index
    %20 = vector.load %arg8[%c0_17, %c0_18] : memref<8x128xf32, #tpu.memory_space<vmem>>, vector<8x128xf32>
    tpu.vector_store %arg8[%c0_17, %c0_18], %19 {strides = array<i32>} : memref<8x128xf32, #tpu.memory_space<vmem>>, vector<8x128xf32>,
    return
  }
  func.func @transform_0(%arg0: i32) -> (i32, i32) {
    %c0_i32 = arith.constant 0 : i32
    %c0_i32_0 = arith.constant 0 : i32
    return %arg0, %c0_i32 : i32, i32
  }
  func.func @transform_1(%arg0: i32) -> (i32, i32) {
    %c0_i32 = arith.constant 0 : i32
    %c0_i32_0 = arith.constant 0 : i32
    %c0_i32_1 = arith.constant 0 : i32
    return %c0_i32, %c0_i32_0 : i32, i32
  }
  func.func @transform_2(%arg0: i32) -> (i32, i32) {
    %c0_i32 = arith.constant 0 : i32
    %c0_i32_0 = arith.constant 0 : i32
    %c0_i32_1 = arith.constant 0 : i32
    return %c0_i32, %c0_i32_0 : i32, i32
  }
  func.func @transform_3(%arg0: i32) -> (i32, i32) {
    %c0_i32 = arith.constant 0 : i32
    %c0_i32_0 = arith.constant 0 : i32
    %c0_i32_1 = arith.constant 0 : i32
    return %c0_i32, %c0_i32_0 : i32, i32
  }
  func.func @transform_4(%arg0: i32) -> (i32, i32) {
    %c0_i32 = arith.constant 0 : i32
    %c0_i32_0 = arith.constant 0 : i32
    %c0_i32_1 = arith.constant 0 : i32
    return %c0_i32, %c0_i32_0 : i32, i32
  }
  func.func @transform_5(%arg0: i32) -> (i32, i32) {
    %c0_i32 = arith.constant 0 : i32
    %c0_i32_0 = arith.constant 0 : i32
    %c0_i32_1 = arith.constant 0 : i32
    return %c0_i32, %c0_i32_0 : i32, i32
  }
  func.func @transform_6(%arg0: i32) -> (i32, i32) {
    %c0_i32 = arith.constant 0 : i32
    %c0_i32_0 = arith.constant 0 : i32
    %c0_i32_1 = arith.constant 0 : i32
    return %c0_i32, %c0_i32_0 : i32, i32
  }
  func.func @transform_7(%arg0: i32) -> (i32, i32) {
    %c0_i32 = arith.constant 0 : i32
    %c0_i32_0 = arith.constant 0 : i32
    return %arg0, %c0_i32 : i32, i32
  }
}

</mosaic_0001>

<llo_original>
// kernel: _actor_forward_fused.1
$region0: #{_actor_forward_fused.1}
  #allocation0 [shape = 'u32[]', space=smem, size = 0x4, offset = 0x4, fixed_abs, tag = 'smem constant byte address 0x4 - core index']
  #allocation1 [shape = 'u32[72,128]{1,0:T(1,128)}', space=vmem, size = 0x9000, scoped, tag = 'internal scratch']
  %s0 = inlined_call_operand.hbm [shape: f32[8,32], index: 0, kind: input, shape index: {}]
  %s1 = inlined_call_operand.hbm [shape: f32[32,128], index: 1, kind: input, shape index: {}]
  %s2 = inlined_call_operand.vmem [shape: f32[1,128], index: 2, kind: input, shape index: {}]
  %s3 = inlined_call_operand.hbm [shape: f32[128,128], index: 3, kind: input, shape index: {}]
  %s4 = inlined_call_operand.vmem [shape: f32[1,128], index: 4, kind: input, shape index: {}]
  %s5 = inlined_call_operand.hbm [shape: f32[128,128], index: 5, kind: input, shape index: {}]
  %s6 = inlined_call_operand.vmem [shape: f32[1,128], index: 6, kind: input, shape index: {}]
  %s7 = inlined_call_operand.hbm [shape: f32[8,128], index: 7, kind: output, shape index: {}]
  %s8 = sld [smem:[#allocation0]]
  $region54: #{_actor_forward_fused.1} parent=0
    _
  %s10 = ssub.s32 1, %s8
  %s11 = scalar_select 0, %s10, %s8
  $region1: #{_actor_forward_fused.1} parent=0
    #allocation2 [shape = 'u8[4096]{0}', space=vmem, size = 0x1000, scoped, tag = 'input window, operand 0, single buffered']
    #allocation3 [shape = 's32[1]{0}', space=sflag, size = 0x4, scoped, tag = 'scoped memory for _actor_forward_fused.1']
    #allocation4 [shape = 's32[1]{0}', space=sflag, size = 0x4, scoped, tag = 'scoped memory for _actor_forward_fused.1']
    #allocation5 [shape = 'u8[16384]{0}', space=vmem, size = 0x4000, scoped, tag = 'input window, operand 1, single buffered']
    #allocation6 [shape = 's32[1]{0}', space=sflag, size = 0x4, scoped, tag = 'scoped memory for _actor_forward_fused.1']
    #allocation7 [shape = 'u8[65536]{0}', space=vmem, size = 0x10000, scoped, tag = 'input window, operand 3, single buffered']
    #allocation8 [shape = 'u8[65536]{0}', space=vmem, size = 0x10000, scoped, tag = 'input window, operand 5, single buffered']
    #allocation9 [shape = 's32[1]{0}', space=sflag, size = 0x4, scoped, tag = 'scoped memory for _actor_forward_fused.1']
    #allocation10 [shape = 'u8[4096]{0}', space=vmem, size = 0x1000, scoped, tag = 'output window, operand 0, single buffered']
    %12 = vsyncpa [#allocation3], 0
    %13 = vsyncpa [#allocation6], 0
    %14 = vsyncpa [#allocation9], 0
    %15 = vsyncpa [#allocation4], 0
    // Predicated region
    $region2: #{_actor_forward_fused.1} parent=1 // pred_check
      _
    $region3: #{_actor_forward_fused.1} parent=1 // pred_check_branch
      %17 = sbr.rel (0) target = $region5
    $region4: #{_actor_forward_fused.1} parent=1 // pred_region
      %19 = vsyncadd [#allocation3], 0
      %s21 = sshll.u32 %s0, 4
      %s22 = int_to_ptr.hbm [resolvable:$true] %s21
      %s23 = sshll.u32 [#allocation2], 4
      %s24 = int_to_ptr.vmem [resolvable:$true] %s23
      %26 = dma.hbm_to_vmem [thread:$0]  %s22, 128, %s24, [#allocation3]
    $region5: #{_actor_forward_fused.1} parent=1 // pred_fallthru
      _
    // Predicated region
    $region6: #{_actor_forward_fused.1} parent=1 // pred_check
      _
    $region7: #{_actor_forward_fused.1} parent=1 // pred_check_branch
      %28 = sbr.rel (0) target = $region9
    $region8: #{_actor_forward_fused.1} parent=1 // pred_region
      %30 = vsyncadd [#allocation6], 0
      %s31 = sshll.u32 %s1, 4
      %s32 = int_to_ptr.hbm [resolvable:$true] %s31
      %s33 = sshll.u32 [#allocation5], 4
      %s34 = int_to_ptr.vmem [resolvable:$true] %s33
      %39 = dma.hbm_to_vmem [thread:$0]  %s32, 512, %s34, [#allocation6], 128, 128, 8
    $region9: #{_actor_forward_fused.1} parent=1 // pred_fallthru
      _
    // Predicated region
    $region10: #{_actor_forward_fused.1} parent=1 // pred_check
      _
    $region11: #{_actor_forward_fused.1} parent=1 // pred_check_branch
      %41 = sbr.rel (0) target = $region13
    $region12: #{_actor_forward_fused.1} parent=1 // pred_region
      _
    $region13: #{_actor_forward_fused.1} parent=1 // pred_fallthru
      _
    // Predicated region
    $region14: #{_actor_forward_fused.1} parent=1 // pred_check
      _
    $region15: #{_actor_forward_fused.1} parent=1 // pred_check_branch
      %43 = sbr.rel (0) target = $region17
    $region16: #{_actor_forward_fused.1} parent=1 // pred_region
      %45 = vsyncadd [#allocation6], 0
      %s46 = sshll.u32 %s3, 4
      %s47 = int_to_ptr.hbm [resolvable:$true] %s46
      %s48 = sshll.u32 [#allocation7], 4
      %s49 = int_to_ptr.vmem [resolvable:$true] %s48
      %54 = dma.hbm_to_vmem [thread:$0]  %s47, 2048, %s49, [#allocation6], 128, 128, 8
    $region17: #{_actor_forward_fused.1} parent=1 // pred_fallthru
      _
    // Predicated region
    $region18: #{_actor_forward_fused.1} parent=1 // pred_check
      _
    $region19: #{_actor_forward_fused.1} parent=1 // pred_check_branch
      %56 = sbr.rel (0) target = $region21
    $region20: #{_actor_forward_fused.1} parent=1 // pred_region
      _
    $region21: #{_actor_forward_fused.1} parent=1 // pred_fallthru
      _
    // Predicated region
    $region22: #{_actor_forward_fused.1} parent=1 // pred_check
      _
    $region23: #{_actor_forward_fused.1} parent=1 // pred_check_branch
      %58 = sbr.rel (0) target = $region25
    $region24: #{_actor_forward_fused.1} parent=1 // pred_region
      %60 = vsyncadd [#allocation9], 0
      %s61 = sshll.u32 %s5, 4
      %s62 = int_to_ptr.hbm [resolvable:$true] %s61
      %s63 = sshll.u32 [#allocation8], 4
      %s64 = int_to_ptr.vmem [resolvable:$true] %s63
      %69 = dma.hbm_to_vmem [thread:$0]  %s62, 2048, %s64, [#allocation9], 128, 128, 8
    $region25: #{_actor_forward_fused.1} parent=1 // pred_fallthru
      _
    // Predicated region
    $region26: #{_actor_forward_fused.1} parent=1 // pred_check
      _
    $region27: #{_actor_forward_fused.1} parent=1 // pred_check_branch
      %71 = sbr.rel (0) target = $region29
    $region28: #{_actor_forward_fused.1} parent=1 // pred_region
      _
    $region29: #{_actor_forward_fused.1} parent=1 // pred_fallthru
      _
    // Predicated region
    $region30: #{_actor_forward_fused.1} parent=1 // pred_check
      _
    $region31: #{_actor_forward_fused.1} parent=1 // pred_check_branch
      %73 = sbr.rel (0) target = $region33
    $region32: #{_actor_forward_fused.1} parent=1 // pred_region
      %75 = dma.done [#allocation3], 128
    $region33: #{_actor_forward_fused.1} parent=1 // pred_fallthru
      _
    // Predicated region
    $region34: #{_actor_forward_fused.1} parent=1 // pred_check
      _
    $region35: #{_actor_forward_fused.1} parent=1 // pred_check_branch
      %77 = sbr.rel (0) target = $region37
    $region36: #{_actor_forward_fused.1} parent=1 // pred_region
      %79 = dma.done [#allocation6], 512
    $region37: #{_actor_forward_fused.1} parent=1 // pred_fallthru
      _
    // Predicated region
    $region38: #{_actor_forward_fused.1} parent=1 // pred_check
      _
    $region39: #{_actor_forward_fused.1} parent=1 // pred_check_branch
      %81 = sbr.rel (0) target = $region41
    $region40: #{_actor_forward_fused.1} parent=1 // pred_region
      %83 = dma.done [#allocation6], 2048
    $region41: #{_actor_forward_fused.1} parent=1 // pred_fallthru
      _
    // Predicated region
    $region42: #{_actor_forward_fused.1} parent=1 // pred_check
      _
    $region43: #{_actor_forward_fused.1} parent=1 // pred_check_branch
      %85 = sbr.rel (0) target = $region45
    $region44: #{_actor_forward_fused.1} parent=1 // pred_region
      %87 = dma.done [#allocation9], 2048
    $region45: #{_actor_forward_fused.1} parent=1 // pred_fallthru
      _
    %v88 = vld [vmem:[#allocation2] sm:$0xff]
    %v89 = vld [vmem:[#allocation5] sm:$0xff]
    %v90 = vld [vmem:[#allocation5 + $0x8] sm:$0xff]
    %v91 = vld [vmem:[#allocation5 + $0x10] sm:$0xff]
    %v92 = vld [vmem:[#allocation5 + $0x18] sm:$0xff]
    %v93 = vld [vmem:[%s2] sm:$0x1]
    %v95 = vperm.slane %v93, 0
    %vm97 = vcmask 261120
    %v99 = vsel %vm97, %v88, 0
    %101 = vmatpush.msra.mxu0 0.0
    %102 = vmatpush.msra.mxu0 0.0
    %103 = vmatpush.msra.mxu0 0.0
    %104 = vmatpush.msra.mxu0 0.0
    %105 = vmatpush.msra.mxu0 0.0
    %106 = vmatpush.msra.mxu0 0.0
    %107 = vmatpush.msra.mxu0 0.0
    %108 = vmatpush.msra.mxu0 0.0
    %109 = vmatpush.msra.mxu0 0.0
    %110 = vmatpush.msra.mxu0 0.0
    %111 = vmatpush.msra.mxu0 0.0
    %112 = vmatpush.msra.mxu0 0.0
    %113 = vmatpush.msra.mxu0 %v92
    %114 = vmatpush.msra.mxu0 %v91
    %115 = vmatpush.msra.mxu0 %v90
    %116 = vmatpush.msra.mxu0 %v89
    %117 = vmatmul.f32.gmra.mxu0 %v99
    %v118 = vpop.f32.mrf.mxu0
    %v119 = vadd.f32 %v95, %v118
    %120 = vdwg.mxu0
    %v121 = vmax.f32 %v119, 0.0
    %v122 = vld [vmem:[#allocation7] sm:$0xff]
    %v123 = vld [vmem:[#allocation7 + $0x8] sm:$0xff]
    %v124 = vld [vmem:[#allocation7 + $0x10] sm:$0xff]
    %v125 = vld [vmem:[#allocation7 + $0x18] sm:$0xff]
    %v126 = vld [vmem:[#allocation7 + $0x20] sm:$0xff]
    %v127 = vld [vmem:[#allocation7 + $0x28] sm:$0xff]
    %v128 = vld [vmem:[#allocation7 + $0x30] sm:$0xff]
    %v129 = vld [vmem:[#allocation7 + $0x38] sm:$0xff]
    %v130 = vld [vmem:[#allocation7 + $0x40] sm:$0xff]
    %v131 = vld [vmem:[#allocation7 + $0x48] sm:$0xff]
    %v132 = vld [vmem:[#allocation7 + $0x50] sm:$0xff]
    %v133 = vld [vmem:[#allocation7 + $0x58] sm:$0xff]
    %v134 = vld [vmem:[#allocation7 + $0x60] sm:$0xff]
    %v135 = vld [vmem:[#allocation7 + $0x68] sm:$0xff]
    %v136 = vld [vmem:[#allocation7 + $0x70] sm:$0xff]
    %v137 = vld [vmem:[#allocation7 + $0x78] sm:$0xff]
    %v138 = vld [vmem:[%s4] sm:$0x1]
    %v140 = vperm.slane %v138, 0
    %142 = vmatpush.msra.mxu0 %v137
    %143 = vmatpush.msra.mxu0 %v136
    %144 = vmatpush.msra.mxu0 %v135
    %145 = vmatpush.msra.mxu0 %v134
    %146 = vmatpush.msra.mxu0 %v133
    %147 = vmatpush.msra.mxu0 %v132
    %148 = vmatpush.msra.mxu0 %v131
    %149 = vmatpush.msra.mxu0 %v130
    %150 = vmatpush.msra.mxu0 %v129
    %151 = vmatpush.msra.mxu0 %v128
    %152 = vmatpush.msra.mxu0 %v127
    %153 = vmatpush.msra.mxu0 %v126
    %154 = vmatpush.msra.mxu0 %v125
    %155 = vmatpush.msra.mxu0 %v124
    %156 = vmatpush.msra.mxu0 %v123
    %157 = vmatpush.msra.mxu0 %v122
    %158 = vmatmul.f32.gmra.mxu0 %v121
    %v159 = vpop.f32.mrf.mxu0
    %v160 = vadd.f32 %v140, %v159
    %161 = vdwg.mxu0
    %v162 = vmax.f32 %v160, 0.0
    %v163 = vld [vmem:[#allocation8] sm:$0xff]
    %v164 = vld [vmem:[#allocation8 + $0x8] sm:$0xff]
    %v165 = vld [vmem:[#allocation8 + $0x10] sm:$0xff]
    %v166 = vld [vmem:[#allocation8 + $0x18] sm:$0xff]
    %v167 = vld [vmem:[#allocation8 + $0x20] sm:$0xff]
    %v168 = vld [vmem:[#allocation8 + $0x28] sm:$0xff]
    %v169 = vld [vmem:[#allocation8 + $0x30] sm:$0xff]
    %v170 = vld [vmem:[#allocation8 + $0x38] sm:$0xff]
    %v171 = vld [vmem:[#allocation8 + $0x40] sm:$0xff]
    %v172 = vld [vmem:[#allocation8 + $0x48] sm:$0xff]
    %v173 = vld [vmem:[#allocation8 + $0x50] sm:$0xff]
    %v174 = vld [vmem:[#allocation8 + $0x58] sm:$0xff]
    %v175 = vld [vmem:[#allocation8 + $0x60] sm:$0xff]
    %v176 = vld [vmem:[#allocation8 + $0x68] sm:$0xff]
    %v177 = vld [vmem:[#allocation8 + $0x70] sm:$0xff]
    %v178 = vld [vmem:[#allocation8 + $0x78] sm:$0xff]
    %v179 = vld [vmem:[%s6] sm:$0x1]
    %v181 = vperm.slane %v179, 0
    %183 = vmatpush.msra.mxu0 %v178
    %184 = vmatpush.msra.mxu0 %v177
    %185 = vmatpush.msra.mxu0 %v176
    %186 = vmatpush.msra.mxu0 %v175
    %187 = vmatpush.msra.mxu0 %v174
    %188 = vmatpush.msra.mxu0 %v173
    %189 = vmatpush.msra.mxu0 %v172
    %190 = vmatpush.msra.mxu0 %v171
    %191 = vmatpush.msra.mxu0 %v170
    %192 = vmatpush.msra.mxu0 %v169
    %193 = vmatpush.msra.mxu0 %v168
    %194 = vmatpush.msra.mxu0 %v167
    %195 = vmatpush.msra.mxu0 %v166
    %196 = vmatpush.msra.mxu0 %v165
    %197 = vmatpush.msra.mxu0 %v164
    %198 = vmatpush.msra.mxu0 %v163
    %199 = vmatmul.f32.gmra.mxu0 %v162
    %v200 = vpop.f32.mrf.mxu0
    %v201 = vadd.f32 %v181, %v200
    %202 = vdwg.mxu0
    %203 = vst [vmem:[#allocation10] sm:$0xff] %v201
    // Predicated region
    $region46: #{_actor_forward_fused.1} parent=1 // pred_check
      _
    $region47: #{_actor_forward_fused.1} parent=1 // pred_check_branch
      %205 = sbr.rel (0) target = $region49
    $region48: #{_actor_forward_fused.1} parent=1 // pred_region
      %207 = vsyncadd [#allocation4], 0
      %s209 = sshll.u32 [#allocation10], 4
      %s210 = int_to_ptr.vmem [resolvable:$true] %s209
      %s211 = sshll.u32 %s7, 4
      %s212 = int_to_ptr.hbm [resolvable:$true] %s211
      %214 = dma.vmem_to_hbm [thread:$0]  %s210, 128, %s212, [#allocation4]
    $region49: #{_actor_forward_fused.1} parent=1 // pred_fallthru
      _
    // Predicated region
    $region50: #{_actor_forward_fused.1} parent=1 // pred_check
      _
    $region51: #{_actor_forward_fused.1} parent=1 // pred_check_branch
      %216 = sbr.rel (0) target = $region53
    $region52: #{_actor_forward_fused.1} parent=1 // pred_region
      %218 = dma.done [#allocation4], 128
    $region53: #{_actor_forward_fused.1} parent=1 // pred_fallthru
      _
    %219 = vsyncpa [#allocation3], 1
    %220 = vsyncpa [#allocation6], 1
    %221 = vsyncpa [#allocation9], 1
    %222 = vsyncpa [#allocation4], 1

</llo_original>
